<compile_context>
chip_gen: v7x
topology: tpu7x:2x2x1
jax: 0.10.0
libtpu: 0.0.40
codegen_flags: <defaults>
</compile_context>

<pallas_src>
import functools

import jax
import jax.numpy as jnp
from jax.experimental import pallas as pl
from jax.experimental.pallas import tpu as pltpu


def _dsconv_kernel(x_ref, dw_ref, b1_ref, pw_ref, b2_ref, out_ref, *, hh, ww):
    """Fused depthwise-separable conv, single invocation, lane-dense layout.

    x_ref  : (N*Cin, H*W)      input  (channels on sublanes, pixels on lanes)
    dw_ref : (9, N*Cin, H*W)   depthwise 3x3 weights, BN1 scale folded,
                               pre-broadcast along lanes
    b1_ref : (N*Cin, H*W)      folded BN1 shift, pre-broadcast
    pw_ref : (N*Cout, N*Cin)   block-diagonal pointwise weights, BN2 scale folded
    b2_ref : (N*Cout, H*W)     folded BN2 shift, pre-broadcast
    out_ref: (N*Cout, H*W)
    """
    nc, hw = x_ref.shape
    x = x_ref[...]

    # Full-tile lane-position index (a (1,hw) iota occupies the same padded
    # vregs, so full-shape is free and avoids per-tap sublane mask broadcasts).
    pos = jax.lax.broadcasted_iota(jnp.int32, (nc, hw), 1)
    if (ww & (ww - 1)) == 0:
        w_idx = jnp.bitwise_and(pos, ww - 1)              # pos % W (W power of 2)
    else:
        w_idx = pos % ww

    # ---- depthwise 3x3, stride 1, zero pad 1: 9 taps via XLU rolls + masks ----
    # Accumulation starts at the folded BN1 shift (bias add comes for free).
    acc = b1_ref[...]
    for ky in range(3):
        for kx in range(3):
            t = ky * 3 + kx
            d = (ky - 1) * ww + (kx - 1)                  # flat tap offset
            tap = x if d == 0 else pltpu.roll(x, shift=(-d) % hw, axis=1)
            conds = []
            if ky == 0:
                conds.append(pos >= ww)                   # h-1 >= 0
            elif ky == 2:
                conds.append(pos < (hh - 1) * ww)         # h+1 <= H-1
            if kx == 0:
                conds.append(w_idx >= 1)                  # w-1 >= 0
            elif kx == 2:
                conds.append(w_idx <= ww - 2)             # w+1 <= W-1
            if conds:
                valid = conds[0]
                for cnd in conds[1:]:
                    valid = jnp.logical_and(valid, cnd)
                tap = jnp.where(valid, tap, 0.0)          # zero-pad, NaN-safe
            acc = acc + tap * dw_ref[t]                   # plain vreg*vreg FMA

    # BN1 (scale folded into dw, shift already in acc) + ReLU; lives in vregs.
    h = jnp.maximum(acc, 0.0)

    # ---- pointwise 1x1 + BN2 + ReLU: single block-diagonal MXU matmul ----
    y = jnp.dot(pw_ref[...], h,
                preferred_element_type=jnp.float32,
                precision=jax.lax.Precision.HIGHEST)
    out_ref[...] = jnp.maximum(y + b2_ref[...], 0.0).astype(out_ref.dtype)


def prepare_dsconv_params(dw_w, pw_w, s1, b1, s2, b2, n_batch, hw):
    """One-time BN folding + kernel-layout broadcast (run once per weight set,
    outside the per-call path).  dw_w: (3,3,C); pw_w: (C,Cout); s*/b* are
    eval-mode BatchNorm folded scale/shift."""
    kh, kw, C = dw_w.shape
    assert kh == 3 and kw == 3
    Cout = pw_w.shape[1]

    # Depthwise weights with BN1 scale folded, pre-broadcast along lanes:
    # (9, N*C, HW).  One-time O(weights*HW) HBM cost that removes 9 in-kernel
    # lane-broadcasts of sublane-varying data (would land on the XLU slot).
    dw_f = dw_w.astype(jnp.float32) * s1[None, None, :]                # (3,3,C)
    dw_rows = jnp.tile(dw_f.reshape(9, C), (1, n_batch))               # (9, N*C)
    dw_b = jnp.broadcast_to(dw_rows[:, :, None], (9, n_batch * C, hw))

    # Folded BN1 shift, pre-broadcast; the kernel starts accumulation from it.
    b1_rows = jnp.tile(b1.astype(jnp.float32), n_batch)                # (N*C,)
    b1_b = jnp.broadcast_to(b1_rows[:, None], (n_batch * C, hw))

    # Block-diagonal pointwise matrix (BN2 scale folded): (N*Cout, N*Cin).
    pw_t = (pw_w.astype(jnp.float32) * s2[None, :]).T                  # (Cout, C)
    pw_block = jnp.kron(jnp.eye(n_batch, dtype=jnp.float32), pw_t)     # (N*Cout, N*C)

    # Folded BN2 shift, pre-broadcast: (N*Cout, HW).
    b2_rows = jnp.tile(b2.astype(jnp.float32), n_batch)                # (N*Cout,)
    b2_b = jnp.broadcast_to(b2_rows[:, None], (n_batch * Cout, hw))

    return dw_b, b1_b, pw_block, b2_b


@jax.jit
def depthwise_separable_conv(x_nchw, dw_b, b1_b, pw_block, b2_b):
    """x_nchw: (N, C, H, W) f32; other args from prepare_dsconv_params.
    Returns (N, Cout, H, W)."""
    N, C, H, W = x_nchw.shape
    HW = H * W
    Cout = pw_block.shape[0] // N

    # The circular roll + mask scheme depends on a lane-dense flat image and on
    # the 3x3/pad=1 geometry; assert before generalizing shapes.
    assert HW % 128 == 0, "H*W must be a multiple of 128 (lane-dense layout)"
    assert H >= 2 and W >= 2
    assert dw_b.shape == (9, N * C, HW)
    assert b1_b.shape == (N * C, HW)
    assert pw_block.shape == (N * Cout, N * C)
    assert b2_b.shape == (N * Cout, HW)

    # Lane-dense kernel layout: pure dim-merge of NCHW (no transpose, no pad).
    x_flat = x_nchw.reshape(N * C, HW).astype(jnp.float32)

    kernel = functools.partial(_dsconv_kernel, hh=H, ww=W)

    out_flat = pl.pallas_call(
        kernel,
        out_shape=jax.ShapeDtypeStruct((N * Cout, HW), jnp.float32),
        in_specs=[pl.BlockSpec(memory_space=pltpu.MemorySpace.VMEM)] * 5,
        out_specs=pl.BlockSpec(memory_space=pltpu.MemorySpace.VMEM),
    )(x_flat, dw_b, b1_b, pw_block, b2_b)

    # Free dim-split back to NCHW.
    return out_flat.reshape(N, Cout, H, W)


def _reference(x_nchw, dw_w_oihw, pw_w_oihw, s1, b1, s2, b2):
    """Pure-JAX reference matching PyTorch semantics (BN in eval mode)."""
    C = x_nchw.shape[1]
    y = jax.lax.conv_general_dilated(
        x_nchw, dw_w_oihw, (1, 1), "SAME", feature_group_count=C,
        dimension_numbers=("NCHW", "OIHW", "NCHW"),
        precision=jax.lax.Precision.HIGHEST)
    y = jnp.maximum(y * s1[None, :, None, None] + b1[None, :, None, None], 0.0)
    y = jax.lax.conv_general_dilated(
        y, pw_w_oihw, (1, 1), "VALID",
        dimension_numbers=("NCHW", "OIHW", "NCHW"),
        precision=jax.lax.Precision.HIGHEST)
    y = jnp.maximum(y * s2[None, :, None, None] + b2[None, :, None, None], 0.0)
    return y


if __name__ == "__main__":
    # Small shapes consistent with the module: nin=4, nout=8, kernels_per_layer=1.
    N, C, H, W = 2, 4, 16, 16
    Cout = 8
    eps = 1e-5

    key = jax.random.PRNGKey(0)
    k_x, k_dw, k_pw, k_g1, k_b1, k_m1, k_v1, k_g2, k_b2, k_m2, k_v2 = (
        jax.random.split(key, 11))

    x = jax.random.normal(k_x, (N, C, H, W), jnp.float32)

    # Depthwise Conv2d(C, C, 3, pad=1, groups=C, bias=False): weight (C, 1, 3, 3)
    dw_w_oihw = 0.1 * jax.random.normal(k_dw, (C, 1, 3, 3), jnp.float32)
    # Pointwise Conv2d(C, Cout, 1, bias=False): weight (Cout, C, 1, 1)
    pw_w_oihw = 0.1 * jax.random.normal(k_pw, (Cout, C, 1, 1), jnp.float32)

    # BatchNorm params / running stats (inference mode, folded to scale/shift).
    # TODO(synk): training-mode BN (running-stat updates) is not implemented.
    g1 = 1.0 + 0.1 * jax.random.normal(k_g1, (C,), jnp.float32)
    be1 = 0.1 * jax.random.normal(k_b1, (C,), jnp.float32)
    rm1 = 0.1 * jax.random.normal(k_m1, (C,), jnp.float32)
    rv1 = jax.random.uniform(k_v1, (C,), jnp.float32, 0.5, 1.5)
    g2 = 1.0 + 0.1 * jax.random.normal(k_g2, (Cout,), jnp.float32)
    be2 = 0.1 * jax.random.normal(k_b2, (Cout,), jnp.float32)
    rm2 = 0.1 * jax.random.normal(k_m2, (Cout,), jnp.float32)
    rv2 = jax.random.uniform(k_v2, (Cout,), jnp.float32, 0.5, 1.5)

    s1 = g1 / jnp.sqrt(rv1 + eps)
    b1 = be1 - rm1 * s1
    s2 = g2 / jnp.sqrt(rv2 + eps)
    b2 = be2 - rm2 * s2

    # Kernel-layout weights: depthwise (3,3,C), pointwise (C,Cout).
    dw_w = jnp.transpose(dw_w_oihw[:, 0, :, :], (1, 2, 0))          # (3,3,C)
    pw_w = jnp.transpose(pw_w_oihw[:, :, 0, 0], (1, 0))             # (C,Cout)

    # One-time weight/BN folding, outside the per-call jitted path.
    params = prepare_dsconv_params(dw_w, pw_w, s1, b1, s2, b2,
                                   n_batch=N, hw=H * W)

    out = depthwise_separable_conv(x, *params)
    out = jax.block_until_ready(out)

    ref = _reference(x, dw_w_oihw, pw_w_oihw, s1, b1, s2, b2)
    assert out.shape == (N, Cout, H, W)
    assert jnp.allclose(out, ref, atol=1e-4, rtol=1e-4), "mismatch vs reference"

    print("KERNEL_OK")
</pallas_src>

<mosaic_0001>
module attributes {stable_mosaic.version = 11 : i64} {
  func.func @_dsconv_kernel(%arg0: memref<8x256xf32, #tpu.memory_space<vmem>>, %arg1: memref<9x8x256xf32, #tpu.memory_space<vmem>>, %arg2: memref<8x256xf32, #tpu.memory_space<vmem>>, %arg3: memref<16x8xf32, #tpu.memory_space<vmem>>, %arg4: memref<16x256xf32, #tpu.memory_space<vmem>>, %arg5: memref<16x256xf32, #tpu.memory_space<vmem>>) attributes {dimension_semantics = [], scalar_prefetch = 0 : i64, scratch_operands = 0 : i64, tpu.core_type = #tpu.core_type<tc>} {
    %c0 = arith.constant 0 : index
    %c0_0 = arith.constant 0 : index
    %0 = vector.load %arg0[%c0, %c0_0] : memref<8x256xf32, #tpu.memory_space<vmem>>, vector<8x256xf32>
    %1 = tpu.iota {dimensions = array<i32: 1>} : vector<8x256xi32>
    %c15_i32 = arith.constant 15 : i32
    %2 = vector.broadcast %c15_i32 : i32 to vector<8x256xi32>
    %3 = arith.andi %1, %2 : vector<8x256xi32>
    %c0_1 = arith.constant 0 : index
    %c0_2 = arith.constant 0 : index
    %4 = vector.load %arg2[%c0_1, %c0_2] : memref<8x256xf32, #tpu.memory_space<vmem>>, vector<8x256xf32>
    %c17_i32 = arith.constant 17 : i32
    %5 = tpu.dynamic_rotate %0 by %c17_i32 dim 1 : vector<8x256xf32>, i32 -> vector<8x256xf32>
    %c16_i32 = arith.constant 16 : i32
    %6 = vector.broadcast %c16_i32 : i32 to vector<8x256xi32>
    %7 = arith.cmpi sge, %1, %6 : vector<8x256xi32>
    %c1_i32 = arith.constant 1 : i32
    %8 = vector.broadcast %c1_i32 : i32 to vector<8x256xi32>
    %9 = arith.cmpi sge, %3, %8 : vector<8x256xi32>
    %10 = arith.andi %7, %9 : vector<8x256xi1>
    %cst = arith.constant 0.000000e+00 : f32
    %11 = vector.broadcast %cst : f32 to vector<8x256xf32>
    %12 = arith.select %10, %5, %11 : vector<8x256xi1>, vector<8x256xf32>
    %c0_3 = arith.constant 0 : index
    %c0_4 = arith.constant 0 : index
    %c0_5 = arith.constant 0 : index
    %13 = vector.load %arg1[%c0_3, %c0_4, %c0_5] : memref<9x8x256xf32, #tpu.memory_space<vmem>>, vector<1x8x256xf32>
    %14 = vector.shape_cast %13 : vector<1x8x256xf32> to vector<8x256xf32>
    %15 = arith.mulf %12, %14 : vector<8x256xf32>
    %16 = arith.addf %4, %15 : vector<8x256xf32>
    %c16_i32_6 = arith.constant 16 : i32
    %17 = tpu.dynamic_rotate %0 by %c16_i32_6 dim 1 : vector<8x256xf32>, i32 -> vector<8x256xf32>
    %c16_i32_7 = arith.constant 16 : i32
    %18 = vector.broadcast %c16_i32_7 : i32 to vector<8x256xi32>
    %19 = arith.cmpi sge, %1, %18 : vector<8x256xi32>
    %cst_8 = arith.constant 0.000000e+00 : f32
    %20 = vector.broadcast %cst_8 : f32 to vector<8x256xf32>
    %21 = arith.select %19, %17, %20 : vector<8x256xi1>, vector<8x256xf32>
    %c1 = arith.constant 1 : index
    %c0_9 = arith.constant 0 : index
    %c0_10 = arith.constant 0 : index
    %22 = vector.load %arg1[%c1, %c0_9, %c0_10] : memref<9x8x256xf32, #tpu.memory_space<vmem>>, vector<1x8x256xf32>
    %23 = vector.shape_cast %22 : vector<1x8x256xf32> to vector<8x256xf32>
    %24 = arith.mulf %21, %23 : vector<8x256xf32>
    %25 = arith.addf %16, %24 : vector<8x256xf32>
    %c15_i32_11 = arith.constant 15 : i32
    %26 = tpu.dynamic_rotate %0 by %c15_i32_11 dim 1 : vector<8x256xf32>, i32 -> vector<8x256xf32>
    %c16_i32_12 = arith.constant 16 : i32
    %27 = vector.broadcast %c16_i32_12 : i32 to vector<8x256xi32>
    %28 = arith.cmpi sge, %1, %27 : vector<8x256xi32>
    %c14_i32 = arith.constant 14 : i32
    %29 = vector.broadcast %c14_i32 : i32 to vector<8x256xi32>
    %30 = arith.cmpi sle, %3, %29 : vector<8x256xi32>
    %31 = arith.andi %28, %30 : vector<8x256xi1>
    %cst_13 = arith.constant 0.000000e+00 : f32
    %32 = vector.broadcast %cst_13 : f32 to vector<8x256xf32>
    %33 = arith.select %31, %26, %32 : vector<8x256xi1>, vector<8x256xf32>
    %c2 = arith.constant 2 : index
    %c0_14 = arith.constant 0 : index
    %c0_15 = arith.constant 0 : index
    %34 = vector.load %arg1[%c2, %c0_14, %c0_15] : memref<9x8x256xf32, #tpu.memory_space<vmem>>, vector<1x8x256xf32>
    %35 = vector.shape_cast %34 : vector<1x8x256xf32> to vector<8x256xf32>
    %36 = arith.mulf %33, %35 : vector<8x256xf32>
    %37 = arith.addf %25, %36 : vector<8x256xf32>
    %c1_i32_16 = arith.constant 1 : i32
    %38 = tpu.dynamic_rotate %0 by %c1_i32_16 dim 1 : vector<8x256xf32>, i32 -> vector<8x256xf32>
    %c1_i32_17 = arith.constant 1 : i32
    %39 = vector.broadcast %c1_i32_17 : i32 to vector<8x256xi32>
    %40 = arith.cmpi sge, %3, %39 : vector<8x256xi32>
    %cst_18 = arith.constant 0.000000e+00 : f32
    %41 = vector.broadcast %cst_18 : f32 to vector<8x256xf32>
    %42 = arith.select %40, %38, %41 : vector<8x256xi1>, vector<8x256xf32>
    %c3 = arith.constant 3 : index
    %c0_19 = arith.constant 0 : index
    %c0_20 = arith.constant 0 : index
    %43 = vector.load %arg1[%c3, %c0_19, %c0_20] : memref<9x8x256xf32, #tpu.memory_space<vmem>>, vector<1x8x256xf32>
    %44 = vector.shape_cast %43 : vector<1x8x256xf32> to vector<8x256xf32>
    %45 = arith.mulf %42, %44 : vector<8x256xf32>
    %46 = arith.addf %37, %45 : vector<8x256xf32>
    %c4 = arith.constant 4 : index
    %c0_21 = arith.constant 0 : index
    %c0_22 = arith.constant 0 : index
    %47 = vector.load %arg1[%c4, %c0_21, %c0_22] : memref<9x8x256xf32, #tpu.memory_space<vmem>>, vector<1x8x256xf32>
    %48 = vector.shape_cast %47 : vector<1x8x256xf32> to vector<8x256xf32>
    %49 = arith.mulf %0, %48 : vector<8x256xf32>
    %50 = arith.addf %46, %49 : vector<8x256xf32>
    %c255_i32 = arith.constant 255 : i32
    %51 = tpu.dynamic_rotate %0 by %c255_i32 dim 1 : vector<8x256xf32>, i32 -> vector<8x256xf32>
    %c14_i32_23 = arith.constant 14 : i32
    %52 = vector.broadcast %c14_i32_23 : i32 to vector<8x256xi32>
    %53 = arith.cmpi sle, %3, %52 : vector<8x256xi32>
    %cst_24 = arith.constant 0.000000e+00 : f32
    %54 = vector.broadcast %cst_24 : f32 to vector<8x256xf32>
    %55 = arith.select %53, %51, %54 : vector<8x256xi1>, vector<8x256xf32>
    %c5 = arith.constant 5 : index
    %c0_25 = arith.constant 0 : index
    %c0_26 = arith.constant 0 : index
    %56 = vector.load %arg1[%c5, %c0_25, %c0_26] : memref<9x8x256xf32, #tpu.memory_space<vmem>>, vector<1x8x256xf32>
    %57 = vector.shape_cast %56 : vector<1x8x256xf32> to vector<8x256xf32>
    %58 = arith.mulf %55, %57 : vector<8x256xf32>
    %59 = arith.addf %50, %58 : vector<8x256xf32>
    %c241_i32 = arith.constant 241 : i32
    %60 = tpu.dynamic_rotate %0 by %c241_i32 dim 1 : vector<8x256xf32>, i32 -> vector<8x256xf32>
    %c240_i32 = arith.constant 240 : i32
    %61 = vector.broadcast %c240_i32 : i32 to vector<8x256xi32>
    %62 = arith.cmpi slt, %1, %61 : vector<8x256xi32>
    %c1_i32_27 = arith.constant 1 : i32
    %63 = vector.broadcast %c1_i32_27 : i32 to vector<8x256xi32>
    %64 = arith.cmpi sge, %3, %63 : vector<8x256xi32>
    %65 = arith.andi %62, %64 : vector<8x256xi1>
    %cst_28 = arith.constant 0.000000e+00 : f32
    %66 = vector.broadcast %cst_28 : f32 to vector<8x256xf32>
    %67 = arith.select %65, %60, %66 : vector<8x256xi1>, vector<8x256xf32>
    %c6 = arith.constant 6 : index
    %c0_29 = arith.constant 0 : index
    %c0_30 = arith.constant 0 : index
    %68 = vector.load %arg1[%c6, %c0_29, %c0_30] : memref<9x8x256xf32, #tpu.memory_space<vmem>>, vector<1x8x256xf32>
    %69 = vector.shape_cast %68 : vector<1x8x256xf32> to vector<8x256xf32>
    %70 = arith.mulf %67, %69 : vector<8x256xf32>
    %71 = arith.addf %59, %70 : vector<8x256xf32>
    %c240_i32_31 = arith.constant 240 : i32
    %72 = tpu.dynamic_rotate %0 by %c240_i32_31 dim 1 : vector<8x256xf32>, i32 -> vector<8x256xf32>
    %c240_i32_32 = arith.constant 240 : i32
    %73 = vector.broadcast %c240_i32_32 : i32 to vector<8x256xi32>
    %74 = arith.cmpi slt, %1, %73 : vector<8x256xi32>
    %cst_33 = arith.constant 0.000000e+00 : f32
    %75 = vector.broadcast %cst_33 : f32 to vector<8x256xf32>
    %76 = arith.select %74, %72, %75 : vector<8x256xi1>, vector<8x256xf32>
    %c7 = arith.constant 7 : index
    %c0_34 = arith.constant 0 : index
    %c0_35 = arith.constant 0 : index
    %77 = vector.load %arg1[%c7, %c0_34, %c0_35] : memref<9x8x256xf32, #tpu.memory_space<vmem>>, vector<1x8x256xf32>
    %78 = vector.shape_cast %77 : vector<1x8x256xf32> to vector<8x256xf32>
    %79 = arith.mulf %76, %78 : vector<8x256xf32>
    %80 = arith.addf %71, %79 : vector<8x256xf32>
    %c239_i32 = arith.constant 239 : i32
    %81 = tpu.dynamic_rotate %0 by %c239_i32 dim 1 : vector<8x256xf32>, i32 -> vector<8x256xf32>
    %c240_i32_36 = arith.constant 240 : i32
    %82 = vector.broadcast %c240_i32_36 : i32 to vector<8x256xi32>
    %83 = arith.cmpi slt, %1, %82 : vector<8x256xi32>
    %c14_i32_37 = arith.constant 14 : i32
    %84 = vector.broadcast %c14_i32_37 : i32 to vector<8x256xi32>
    %85 = arith.cmpi sle, %3, %84 : vector<8x256xi32>
    %86 = arith.andi %83, %85 : vector<8x256xi1>
    %cst_38 = arith.constant 0.000000e+00 : f32
    %87 = vector.broadcast %cst_38 : f32 to vector<8x256xf32>
    %88 = arith.select %86, %81, %87 : vector<8x256xi1>, vector<8x256xf32>
    %c8 = arith.constant 8 : index
    %c0_39 = arith.constant 0 : index
    %c0_40 = arith.constant 0 : index
    %89 = vector.load %arg1[%c8, %c0_39, %c0_40] : memref<9x8x256xf32, #tpu.memory_space<vmem>>, vector<1x8x256xf32>
    %90 = vector.shape_cast %89 : vector<1x8x256xf32> to vector<8x256xf32>
    %91 = arith.mulf %88, %90 : vector<8x256xf32>
    %92 = arith.addf %80, %91 : vector<8x256xf32>
    %cst_41 = arith.constant 0.000000e+00 : f32
    %93 = vector.broadcast %cst_41 : f32 to vector<8x256xf32>
    %94 = arith.maximumf %92, %93 : vector<8x256xf32>
    %c0_42 = arith.constant 0 : index
    %c0_43 = arith.constant 0 : index
    %95 = vector.load %arg3[%c0_42, %c0_43] : memref<16x8xf32, #tpu.memory_space<vmem>>, vector<16x8xf32>
    %cst_44 = arith.constant dense<0.000000e+00> : vector<16x256xf32>
    %96 = tpu.matmul %95, %94, %cst_44 {dimension_numbers = #tpu.dot_dimension_numbers<[1], [0], [0], [1], [0, 0, 1, 1], [], []>, precision = #tpu.contract_precision<fp32>} : vector<16x8xf32>, vector<8x256xf32>, vector<16x256xf32> -> vector<16x256xf32>
    %c0_45 = arith.constant 0 : index
    %c0_46 = arith.constant 0 : index
    %97 = vector.load %arg4[%c0_45, %c0_46] : memref<16x256xf32, #tpu.memory_space<vmem>>, vector<16x256xf32>
    %98 = arith.addf %96, %97 : vector<16x256xf32>
    %cst_47 = arith.constant 0.000000e+00 : f32
    %99 = vector.broadcast %cst_47 : f32 to vector<16x256xf32>
    %100 = arith.maximumf %98, %99 : vector<16x256xf32>
    %c0_48 = arith.constant 0 : index
    %c0_49 = arith.constant 0 : index
    %101 = vector.load %arg5[%c0_48, %c0_49] : memref<16x256xf32, #tpu.memory_space<vmem>>, vector<16x256xf32>
    tpu.vector_store %arg5[%c0_48, %c0_49], %100 {strides = array<i32>} : memref<16x256xf32, #tpu.memory_space<vmem>>, vector<16x256xf32>,
    return
  }
}

</mosaic_0001>

<llo_original>
// kernel: depthwise_separable_conv.1
$region0: #{depthwise_separable_conv.1}
  #allocation0 [shape = 'u32[]', space=smem, size = 0x4, offset = 0x4, fixed_abs, tag = 'smem constant byte address 0x4 - core index']
  #allocation1 [shape = 'u32[144,128]{1,0:T(1,128)}', space=vmem, size = 0x12000, scoped, tag = 'internal scratch']
  %s0 = inlined_call_operand.vmem [shape: f32[8,256], index: 0, kind: input, shape index: {}]
  %s1 = inlined_call_operand.vmem [shape: f32[9,8,256], index: 1, kind: input, shape index: {}]
  %s2 = inlined_call_operand.hbm [shape: f32[8,256], index: 2, kind: input, shape index: {}]
  %s3 = inlined_call_operand.vmem [shape: f32[16,8], index: 3, kind: input, shape index: {}]
  %s4 = inlined_call_operand.vmem [shape: f32[16,256], index: 4, kind: input, shape index: {}]
  %s5 = inlined_call_operand.vmem [shape: f32[16,256], index: 5, kind: output, shape index: {}]
  %s6 = sld [smem:[#allocation0]]
  $region34: #{depthwise_separable_conv.1} parent=0
    _
  %s8 = ssub.s32 1, %s6
  %s9 = scalar_select 0, %s8, %s6
  $region1: #{depthwise_separable_conv.1} parent=0
    #allocation2 [shape = 'u8[8192]{0}', space=vmem, size = 0x2000, scoped, tag = 'input window, operand 2, single buffered']
    #allocation3 [shape = 's32[1]{0}', space=sflag, size = 0x4, scoped, tag = 'scoped memory for depthwise_separable_conv.1']
    %10 = vsyncpa [#allocation3], 0
    // Predicated region
    $region2: #{depthwise_separable_conv.1} parent=1 // pred_check
      _
    $region3: #{depthwise_separable_conv.1} parent=1 // pred_check_branch
      %12 = sbr.rel (0) target = $region5
    $region4: #{depthwise_separable_conv.1} parent=1 // pred_region
      _
    $region5: #{depthwise_separable_conv.1} parent=1 // pred_fallthru
      _
    // Predicated region
    $region6: #{depthwise_separable_conv.1} parent=1 // pred_check
      _
    $region7: #{depthwise_separable_conv.1} parent=1 // pred_check_branch
      %14 = sbr.rel (0) target = $region9
    $region8: #{depthwise_separable_conv.1} parent=1 // pred_region
      _
    $region9: #{depthwise_separable_conv.1} parent=1 // pred_fallthru
      _
    // Predicated region
    $region10: #{depthwise_separable_conv.1} parent=1 // pred_check
      _
    $region11: #{depthwise_separable_conv.1} parent=1 // pred_check_branch
      %16 = sbr.rel (0) target = $region13
    $region12: #{depthwise_separable_conv.1} parent=1 // pred_region
      %s18 = ssub.s32 256, 256
      %19 = vsyncadd [#allocation3], %s18
      %s21 = sshll.u32 [#allocation2], 4
      %s22 = int_to_ptr.vmem [resolvable:$true] %s21
      %24 = dma.hbm_to_vmem [thread:$0]  %s2, 256, %s22, [#allocation3]
    $region13: #{depthwise_separable_conv.1} parent=1 // pred_fallthru
      _
    // Predicated region
    $region14: #{depthwise_separable_conv.1} parent=1 // pred_check
      _
    $region15: #{depthwise_separable_conv.1} parent=1 // pred_check_branch
      %26 = sbr.rel (0) target = $region17
    $region16: #{depthwise_separable_conv.1} parent=1 // pred_region
      _
    $region17: #{depthwise_separable_conv.1} parent=1 // pred_fallthru
      _
    // Predicated region
    $region18: #{depthwise_separable_conv.1} parent=1 // pred_check
      _
    $region19: #{depthwise_separable_conv.1} parent=1 // pred_check_branch
      %28 = sbr.rel (0) target = $region21
    $region20: #{depthwise_separable_conv.1} parent=1 // pred_region
      _
    $region21: #{depthwise_separable_conv.1} parent=1 // pred_fallthru
      _
    // Predicated region
    $region22: #{depthwise_separable_conv.1} parent=1 // pred_check
      _
    $region23: #{depthwise_separable_conv.1} parent=1 // pred_check_branch
      %30 = sbr.rel (0) target = $region25
    $region24: #{depthwise_separable_conv.1} parent=1 // pred_region
      %31 = dma.done [#allocation3], 256
    $region25: #{depthwise_separable_conv.1} parent=1 // pred_fallthru
      _
    %v32 = vld [vmem:[%s0] sm:$0xff]
    %v33 = vld [vmem:[%s0 + $0x8] sm:$0xff]
    %v34 = vlaneseq
    %v35 = vand.u32 %v34, 127
    %v36 = vadd.s32 %v35, 128
    %v37 = vand.u32 %v35, 15
    %v38 = vand.u32 %v36, 15
    %v39 = vld [vmem:[#allocation2] sm:$0xff]
    %v40 = vld [vmem:[#allocation2 + $0x8] sm:$0xff]
    %41 = vrot.lane.b32.xlu0 %v32, 17
    %v42 = vpop.permute.xlu0 %41
    %43 = vrot.lane.b32.xlu0 %v33, 17
    %v44 = vpop.permute.xlu0 %43
    %vm45 = vcmp.lt.s32.totalorder %v35, 17
    %v46 = vsel %vm45, %v42, %v44
    %v47 = vsel %vm45, %v44, %v42
    %vm48 = vcmp.ge.s32.totalorder %v35, 16
    %vm49 = vcmp.ge.s32.totalorder %v36, 16
    %vm50 = vcmp.ge.s32.totalorder %v37, 1
    %vm51 = vcmp.ge.s32.totalorder %v38, 1
    %vm52 = vmand %vm48, %vm50
    %vm53 = vmand %vm49, %vm51
    %v54 = vsel %vm52, %v47, 0.0
    %v55 = vsel %vm53, %v46, 0.0
    %v56 = vld [vmem:[%s1] sm:$0xff]
    %v57 = vld [vmem:[%s1 + $0x8] sm:$0xff]
    %v58 = vmul.f32 %v54, %v56
    %v59 = vmul.f32 %v55, %v57
    %v60 = vadd.f32 %v39, %v58
    %v61 = vadd.f32 %v40, %v59
    %62 = vrot.lane.b32.xlu0 %v32, 16
    %v63 = vpop.permute.xlu0 %62
    %64 = vrot.lane.b32.xlu0 %v33, 16
    %v65 = vpop.permute.xlu0 %64
    %vm66 = vcmp.lt.s32.totalorder %v35, 16
    %v67 = vsel %vm66, %v63, %v65
    %v68 = vsel %vm66, %v65, %v63
    %v69 = vsel %vm48, %v68, 0.0
    %v70 = vsel %vm49, %v67, 0.0
    %s71 = scalar_lea.vmem %s1, 16
    %v72 = vld [vmem:[%s71] sm:$0xff]
    %v73 = vld [vmem:[%s71 + $0x8] sm:$0xff]
    %v74 = vmul.f32 %v69, %v72
    %v75 = vmul.f32 %v70, %v73
    %v76 = vadd.f32 %v60, %v74
    %v77 = vadd.f32 %v61, %v75
    %78 = vrot.lane.b32.xlu0 %v32, 15
    %v79 = vpop.permute.xlu0 %78
    %80 = vrot.lane.b32.xlu0 %v33, 15
    %v81 = vpop.permute.xlu0 %80
    %vm82 = vcmp.lt.s32.totalorder %v35, 15
    %v83 = vsel %vm82, %v79, %v81
    %v84 = vsel %vm82, %v81, %v79
    %vm85 = vcmp.le.s32.totalorder %v37, 14
    %vm86 = vcmp.le.s32.totalorder %v38, 14
    %vm87 = vmand %vm48, %vm85
    %vm88 = vmand %vm49, %vm86
    %v89 = vsel %vm87, %v84, 0.0
    %v90 = vsel %vm88, %v83, 0.0
    %s91 = scalar_lea.vmem %s1, 32
    %v92 = vld [vmem:[%s91] sm:$0xff]
    %v93 = vld [vmem:[%s91 + $0x8] sm:$0xff]
    %v94 = vmul.f32 %v89, %v92
    %v95 = vmul.f32 %v90, %v93
    %v96 = vadd.f32 %v76, %v94
    %v97 = vadd.f32 %v77, %v95
    %98 = vrot.lane.b32.xlu0 %v32, 1
    %v99 = vpop.permute.xlu0 %98
    %100 = vrot.lane.b32.xlu0 %v33, 1
    %v101 = vpop.permute.xlu0 %100
    %vm102 = vcmp.lt.s32.totalorder %v35, 1
    %v103 = vsel %vm102, %v99, %v101
    %v104 = vsel %vm102, %v101, %v99
    %v105 = vsel %vm50, %v104, 0.0
    %v106 = vsel %vm51, %v103, 0.0
    %s107 = scalar_lea.vmem %s1, 48
    %v108 = vld [vmem:[%s107] sm:$0xff]
    %v109 = vld [vmem:[%s107 + $0x8] sm:$0xff]
    %v110 = vmul.f32 %v105, %v108
    %v111 = vmul.f32 %v106, %v109
    %v112 = vadd.f32 %v96, %v110
    %v113 = vadd.f32 %v97, %v111
    %s114 = scalar_lea.vmem %s1, 64
    %v115 = vld [vmem:[%s114] sm:$0xff]
    %v116 = vld [vmem:[%s114 + $0x8] sm:$0xff]
    %v117 = vmul.f32 %v32, %v115
    %v118 = vmul.f32 %v33, %v116
    %v119 = vadd.f32 %v112, %v117
    %v120 = vadd.f32 %v113, %v118
    %121 = vrot.lane.b32.xlu0 %v32, 127
    %v122 = vpop.permute.xlu0 %121
    %123 = vrot.lane.b32.xlu0 %v33, 127
    %v124 = vpop.permute.xlu0 %123
    %vm125 = vcmp.lt.s32.totalorder %v35, 127
    %v126 = vsel %vm125, %v122, %v124
    %v127 = vsel %vm125, %v124, %v122
    %v128 = vsel %vm85, %v126, 0.0
    %v129 = vsel %vm86, %v127, 0.0
    %s130 = scalar_lea.vmem %s1, 80
    %v131 = vld [vmem:[%s130] sm:$0xff]
    %v132 = vld [vmem:[%s130 + $0x8] sm:$0xff]
    %v133 = vmul.f32 %v128, %v131
    %v134 = vmul.f32 %v129, %v132
    %v135 = vadd.f32 %v119, %v133
    %v136 = vadd.f32 %v120, %v134
    %137 = vrot.lane.b32.xlu0 %v32, 113
    %v138 = vpop.permute.xlu0 %137
    %139 = vrot.lane.b32.xlu0 %v33, 113
    %v140 = vpop.permute.xlu0 %139
    %vm141 = vcmp.lt.s32.totalorder %v35, 113
    %v142 = vsel %vm141, %v138, %v140
    %v143 = vsel %vm141, %v140, %v138
    %vm144 = vcmp.lt.s32.totalorder %v35, 240
    %vm145 = vcmp.lt.s32.totalorder %v36, 240
    %vm146 = vmand %vm144, %vm50
    %vm147 = vmand %vm145, %vm51
    %v148 = vsel %vm146, %v142, 0.0
    %v149 = vsel %vm147, %v143, 0.0
    %s150 = scalar_lea.vmem %s1, 96
    %v151 = vld [vmem:[%s150] sm:$0xff]
    %v152 = vld [vmem:[%s150 + $0x8] sm:$0xff]
    %v153 = vmul.f32 %v148, %v151
    %v154 = vmul.f32 %v149, %v152
    %v155 = vadd.f32 %v135, %v153
    %v156 = vadd.f32 %v136, %v154
    %157 = vrot.lane.b32.xlu0 %v32, 112
    %v158 = vpop.permute.xlu0 %157
    %159 = vrot.lane.b32.xlu0 %v33, 112
    %v160 = vpop.permute.xlu0 %159
    %vm161 = vcmp.lt.s32.totalorder %v35, 112
    %v162 = vsel %vm161, %v158, %v160
    %v163 = vsel %vm161, %v160, %v158
    %v164 = vsel %vm144, %v162, 0.0
    %v165 = vsel %vm145, %v163, 0.0
    %s166 = scalar_lea.vmem %s1, 112
    %v167 = vld [vmem:[%s166] sm:$0xff]
    %v168 = vld [vmem:[%s166 + $0x8] sm:$0xff]
    %v169 = vmul.f32 %v164, %v167
    %v170 = vmul.f32 %v165, %v168
    %v171 = vadd.f32 %v155, %v169
    %v172 = vadd.f32 %v156, %v170
    %173 = vrot.lane.b32.xlu0 %v32, 111
    %v174 = vpop.permute.xlu0 %173
    %175 = vrot.lane.b32.xlu0 %v33, 111
    %v176 = vpop.permute.xlu0 %175
    %vm177 = vcmp.lt.s32.totalorder %v35, 111
    %v178 = vsel %vm177, %v174, %v176
    %v179 = vsel %vm177, %v176, %v174
    %vm180 = vmand %vm144, %vm85
    %vm181 = vmand %vm145, %vm86
    %v182 = vsel %vm180, %v178, 0.0
    %v183 = vsel %vm181, %v179, 0.0
    %s184 = scalar_lea.vmem %s1, 128
    %v185 = vld [vmem:[%s184] sm:$0xff]
    %v186 = vld [vmem:[%s184 + $0x8] sm:$0xff]
    %v187 = vmul.f32 %v182, %v185
    %v188 = vmul.f32 %v183, %v186
    %v189 = vadd.f32 %v171, %v187
    %v190 = vadd.f32 %v172, %v188
    %v191 = vmax.f32 %v189, 0.0
    %v192 = vmax.f32 %v190, 0.0
    %v193 = vld [vmem:[%s3] sm:$0xff]
    %v194 = vld [vmem:[%s3 + $0x8] sm:$0xff]
    %v195 = vld [vmem:[%s4] sm:$0xff]
    %v196 = vld [vmem:[%s4 + $0x8] sm:$0xff]
    %v197 = vld [vmem:[%s4 + $0x10] sm:$0xff]
    %v198 = vld [vmem:[%s4 + $0x18] sm:$0xff]
    %vm199 = vcmask 64512
    %v201 = vsel %vm199, %v193, 0
    %v204 = vsel %vm199, %v194, 0
    %v206 = vand.u32 %v192, 4294901760
    %207 = vmatprep.subr.mxu0 %v206
    %v208 = vand.u32 %v191, 4294901760
    %209 = vmatpush1.msra.mxu0 %v208
    %210 = vmatprep.subr.mxu0 0.0
    %211 = vmatpush1.msra.mxu0 0.0
    %212 = vmatprep.subr.mxu0 0.0
    %213 = vmatpush1.msra.mxu0 0.0
    %214 = vmatprep.subr.mxu0 0.0
    %215 = vmatpush1.msra.mxu0 0.0
    %216 = vmatprep.subr.mxu0 0.0
    %217 = vmatpush1.msra.mxu0 0.0
    %218 = vmatprep.subr.mxu0 0.0
    %219 = vmatpush1.msra.mxu0 0.0
    %220 = vmatprep.subr.mxu0 0.0
    %221 = vmatpush1.msra.mxu0 0.0
    %222 = vmatprep.subr.mxu0 0.0
    %223 = vmatpush1.msra.mxu0 0.0
    %224 = vmatprep.subr.mxu0 0.0
    %225 = vmatpush1.msra.mxu0 0.0
    %226 = vmatprep.subr.mxu0 0.0
    %227 = vmatpush1.msra.mxu0 0.0
    %228 = vmatprep.subr.mxu0 0.0
    %229 = vmatpush1.msra.mxu0 0.0
    %230 = vmatprep.subr.mxu0 0.0
    %231 = vmatpush1.msra.mxu0 0.0
    %232 = vmatprep.subr.mxu0 0.0
    %233 = vmatpush1.msra.mxu0 0.0
    %234 = vmatprep.subr.mxu0 0.0
    %235 = vmatpush1.msra.mxu0 0.0
    %236 = vmatprep.subr.mxu0 0.0
    %237 = vmatpush1.msra.mxu0 0.0
    %238 = vmatprep.subr.mxu0 0.0
    %239 = vmatpush1.msra.mxu0 0.0
    %240 = vmatprep.subr.mxu0 0.0
    %241 = vmatpush1.msra.mxu0 0.0
    %242 = vmatprep.subr.mxu0 0.0
    %243 = vmatpush1.msra.mxu0 0.0
    %244 = vmatprep.subr.mxu0 0.0
    %245 = vmatpush1.msra.mxu0 0.0
    %246 = vmatprep.subr.mxu0 0.0
    %247 = vmatpush1.msra.mxu0 0.0
    %248 = vmatprep.subr.mxu0 0.0
    %249 = vmatpush1.msra.mxu0 0.0
    %250 = vmatprep.subr.mxu0 0.0
    %251 = vmatpush1.msra.mxu0 0.0
    %252 = vmatprep.subr.mxu0 0.0
    %253 = vmatpush1.msra.mxu0 0.0
    %254 = vmatprep.subr.mxu0 0.0
    %255 = vmatpush1.msra.mxu0 0.0
    %256 = vmatprep.subr.mxu0 0.0
    %257 = vmatpush1.msra.mxu0 0.0
    %258 = vmatprep.subr.mxu0 0.0
    %259 = vmatpush1.msra.mxu0 0.0
    %260 = vmatprep.subr.mxu0 0.0
    %261 = vmatpush1.msra.mxu0 0.0
    %262 = vmatprep.subr.mxu0 0.0
    %263 = vmatpush1.msra.mxu0 0.0
    %264 = vmatprep.subr.mxu0 0.0
    %265 = vmatpush1.msra.mxu0 0.0
    %266 = vmatprep.subr.mxu0 0.0
    %267 = vmatpush1.msra.mxu0 0.0
    %268 = vmatprep.subr.mxu0 0.0
    %269 = vmatpush1.msra.mxu0 0.0
    %270 = vmatprep.subr.mxu0 0.0
    %271 = vmatpush1.msra.mxu0 0.0
    %272 = vmatprep.mubr.f32.mxu0 0.0
    %v273 = vand.u32 %v201, 4294901760
    %v274 = vsub.f32 %v201, %v273
    %v275 = vand.u32 %v274, 4294901760
    %v276 = vsub.f32 %v274, %v275
    %v277 = vand.u32 %v276, 4294901760
    %278 = vmatmul.mubr.f32.gmra.mrb[0].mxu0 %v277
    %v279 = vpop.f32.mrb[0].mxu0
    %v280 = vadd.f32 %v195, %v279
    %v281 = vpop.f32.mrb[0].mxu0
    %v282 = vadd.f32 %v196, %v281
    %283 = vmatprep.mubr.f32.mxu0 0.0
    %v284 = vand.u32 %v204, 4294901760
    %v285 = vsub.f32 %v204, %v284
    %v286 = vand.u32 %v285, 4294901760
    %v287 = vsub.f32 %v285, %v286
    %v288 = vand.u32 %v287, 4294901760
    %289 = vmatmul.mubr.f32.gmra.mrb[0].mxu0 %v288
    %v290 = vpop.f32.mrb[0].mxu0
    %v291 = vadd.f32 %v197, %v290
    %v292 = vpop.f32.mrb[0].mxu0
    %v293 = vadd.f32 %v198, %v292
    %294 = vdwg.mxu0
    %v295 = vand.u32 %v192, 4294901760
    %v296 = vsub.f32 %v192, %v295
    %v297 = vand.u32 %v296, 4294901760
    %v298 = vsub.f32 %v296, %v297
    %v299 = vand.u32 %v298, 4294901760
    %300 = vmatprep.subr.mxu0 %v299
    %v301 = vand.u32 %v191, 4294901760
    %v302 = vsub.f32 %v191, %v301
    %v303 = vand.u32 %v302, 4294901760
    %v304 = vsub.f32 %v302, %v303
    %v305 = vand.u32 %v304, 4294901760
    %306 = vmatpush1.msra.mxu0 %v305
    %307 = vmatprep.subr.mxu0 0.0
    %308 = vmatpush1.msra.mxu0 0.0
    %309 = vmatprep.subr.mxu0 0.0
    %310 = vmatpush1.msra.mxu0 0.0
    %311 = vmatprep.subr.mxu0 0.0
    %312 = vmatpush1.msra.mxu0 0.0
    %313 = vmatprep.subr.mxu0 0.0
    %314 = vmatpush1.msra.mxu0 0.0
    %315 = vmatprep.subr.mxu0 0.0
    %316 = vmatpush1.msra.mxu0 0.0
    %317 = vmatprep.subr.mxu0 0.0
    %318 = vmatpush1.msra.mxu0 0.0
    %319 = vmatprep.subr.mxu0 0.0
    %320 = vmatpush1.msra.mxu0 0.0
    %321 = vmatprep.subr.mxu0 0.0
    %322 = vmatpush1.msra.mxu0 0.0
    %323 = vmatprep.subr.mxu0 0.0
    %324 = vmatpush1.msra.mxu0 0.0
    %325 = vmatprep.subr.mxu0 0.0
    %326 = vmatpush1.msra.mxu0 0.0
    %327 = vmatprep.subr.mxu0 0.0
    %328 = vmatpush1.msra.mxu0 0.0
    %329 = vmatprep.subr.mxu0 0.0
    %330 = vmatpush1.msra.mxu0 0.0
    %331 = vmatprep.subr.mxu0 0.0
    %332 = vmatpush1.msra.mxu0 0.0
    %333 = vmatprep.subr.mxu0 0.0
    %334 = vmatpush1.msra.mxu0 0.0
    %335 = vmatprep.subr.mxu0 0.0
    %336 = vmatpush1.msra.mxu0 0.0
    %337 = vmatprep.subr.mxu0 0.0
    %338 = vmatpush1.msra.mxu0 0.0
    %339 = vmatprep.subr.mxu0 0.0
    %340 = vmatpush1.msra.mxu0 0.0
    %341 = vmatprep.subr.mxu0 0.0
    %342 = vmatpush1.msra.mxu0 0.0
    %343 = vmatprep.subr.mxu0 0.0
    %344 = vmatpush1.msra.mxu0 0.0
    %345 = vmatprep.subr.mxu0 0.0
    %346 = vmatpush1.msra.mxu0 0.0
    %347 = vmatprep.subr.mxu0 0.0
    %348 = vmatpush1.msra.mxu0 0.0
    %349 = vmatprep.subr.mxu0 0.0
    %350 = vmatpush1.msra.mxu0 0.0
    %351 = vmatprep.subr.mxu0 0.0
    %352 = vmatpush1.msra.mxu0 0.0
    %353 = vmatprep.subr.mxu0 0.0
    %354 = vmatpush1.msra.mxu0 0.0
    %355 = vmatprep.subr.mxu0 0.0
    %356 = vmatpush1.msra.mxu0 0.0
    %357 = vmatprep.subr.mxu0 0.0
    %358 = vmatpush1.msra.mxu0 0.0
    %359 = vmatprep.subr.mxu0 0.0
    %360 = vmatpush1.msra.mxu0 0.0
    %361 = vmatprep.subr.mxu0 0.0
    %362 = vmatpush1.msra.mxu0 0.0
    %363 = vmatprep.subr.mxu0 0.0
    %364 = vmatpush1.msra.mxu0 0.0
    %365 = vmatprep.subr.mxu0 0.0
    %366 = vmatpush1.msra.mxu0 0.0
    %367 = vmatprep.subr.mxu0 0.0
    %368 = vmatpush1.msra.mxu0 0.0
    %369 = vmatprep.mubr.f32.mxu0 0.0
    %v370 = vand.u32 %v201, 4294901760
    %371 = vmatmul.mubr.f32.gmra.mrb[0].mxu0 %v370
    %v372 = vpop.f32.mrb[0].mxu0
    %v373 = vadd.f32 %v280, %v372
    %v374 = vpop.f32.mrb[0].mxu0
    %v375 = vadd.f32 %v282, %v374
    %376 = vmatprep.mubr.f32.mxu0 0.0
    %v377 = vand.u32 %v204, 4294901760
    %378 = vmatmul.mubr.f32.gmra.mrb[0].mxu0 %v377
    %v379 = vpop.f32.mrb[0].mxu0
    %v380 = vadd.f32 %v291, %v379
    %v381 = vpop.f32.mrb[0].mxu0
    %v382 = vadd.f32 %v293, %v381
    %383 = vdwg.mxu0
    %v384 = vand.u32 %v192, 4294901760
    %v385 = vsub.f32 %v192, %v384
    %386 = vmatprep.subr.mxu0 %v385
    %v387 = vand.u32 %v191, 4294901760
    %v388 = vsub.f32 %v191, %v387
    %389 = vmatpush1.msra.mxu0 %v388
    %390 = vmatprep.subr.mxu0 0.0
    %391 = vmatpush1.msra.mxu0 0.0
    %392 = vmatprep.subr.mxu0 0.0
    %393 = vmatpush1.msra.mxu0 0.0
    %394 = vmatprep.subr.mxu0 0.0
    %395 = vmatpush1.msra.mxu0 0.0
    %396 = vmatprep.subr.mxu0 0.0
    %397 = vmatpush1.msra.mxu0 0.0
    %398 = vmatprep.subr.mxu0 0.0
    %399 = vmatpush1.msra.mxu0 0.0
    %400 = vmatprep.subr.mxu0 0.0
    %401 = vmatpush1.msra.mxu0 0.0
    %402 = vmatprep.subr.mxu0 0.0
    %403 = vmatpush1.msra.mxu0 0.0
    %404 = vmatprep.subr.mxu0 0.0
    %405 = vmatpush1.msra.mxu0 0.0
    %406 = vmatprep.subr.mxu0 0.0
    %407 = vmatpush1.msra.mxu0 0.0
    %408 = vmatprep.subr.mxu0 0.0
    %409 = vmatpush1.msra.mxu0 0.0
    %410 = vmatprep.subr.mxu0 0.0
    %411 = vmatpush1.msra.mxu0 0.0
    %412 = vmatprep.subr.mxu0 0.0
    %413 = vmatpush1.msra.mxu0 0.0
    %414 = vmatprep.subr.mxu0 0.0
    %415 = vmatpush1.msra.mxu0 0.0
    %416 = vmatprep.subr.mxu0 0.0
    %417 = vmatpush1.msra.mxu0 0.0
    %418 = vmatprep.subr.mxu0 0.0
    %419 = vmatpush1.msra.mxu0 0.0
    %420 = vmatprep.subr.mxu0 0.0
    %421 = vmatpush1.msra.mxu0 0.0
    %422 = vmatprep.subr.mxu0 0.0
    %423 = vmatpush1.msra.mxu0 0.0
    %424 = vmatprep.subr.mxu0 0.0
    %425 = vmatpush1.msra.mxu0 0.0
    %426 = vmatprep.subr.mxu0 0.0
    %427 = vmatpush1.msra.mxu0 0.0
    %428 = vmatprep.subr.mxu0 0.0
    %429 = vmatpush1.msra.mxu0 0.0
    %430 = vmatprep.subr.mxu0 0.0
    %431 = vmatpush1.msra.mxu0 0.0
    %432 = vmatprep.subr.mxu0 0.0
    %433 = vmatpush1.msra.mxu0 0.0
    %434 = vmatprep.subr.mxu0 0.0
    %435 = vmatpush1.msra.mxu0 0.0
    %436 = vmatprep.subr.mxu0 0.0
    %437 = vmatpush1.msra.mxu0 0.0
    %438 = vmatprep.subr.mxu0 0.0
    %439 = vmatpush1.msra.mxu0 0.0
    %440 = vmatprep.subr.mxu0 0.0
    %441 = vmatpush1.msra.mxu0 0.0
    %442 = vmatprep.subr.mxu0 0.0
    %443 = vmatpush1.msra.mxu0 0.0
    %444 = vmatprep.subr.mxu0 0.0
    %445 = vmatpush1.msra.mxu0 0.0
    %446 = vmatprep.subr.mxu0 0.0
    %447 = vmatpush1.msra.mxu0 0.0
    %448 = vmatprep.subr.mxu0 0.0
    %449 = vmatpush1.msra.mxu0 0.0
    %450 = vmatprep.subr.mxu0 0.0
    %451 = vmatpush1.msra.mxu0 0.0
    %452 = vmatprep.mubr.f32.mxu0 0.0
    %v453 = vand.u32 %v201, 4294901760
    %v454 = vsub.f32 %v201, %v453
    %455 = vmatmul.mubr.f32.gmra.mrb[0].mxu0 %v454
    %v456 = vpop.f32.mrb[0].mxu0
    %v457 = vadd.f32 %v373, %v456
    %v458 = vpop.f32.mrb[0].mxu0
    %v459 = vadd.f32 %v375, %v458
    %460 = vmatprep.mubr.f32.mxu0 0.0
    %v461 = vand.u32 %v204, 4294901760
    %v462 = vsub.f32 %v204, %v461
    %463 = vmatmul.mubr.f32.gmra.mrb[0].mxu0 %v462
    %v464 = vpop.f32.mrb[0].mxu0
    %v465 = vadd.f32 %v380, %v464
    %v466 = vpop.f32.mrb[0].mxu0
    %v467 = vadd.f32 %v382, %v466
    %468 = vdwg.mxu0
    %v469 = vand.u32 %v192, 4294901760
    %470 = vmatprep.subr.mxu0 %v469
    %v471 = vand.u32 %v191, 4294901760
    %472 = vmatpush1.msra.mxu0 %v471
    %473 = vmatprep.subr.mxu0 0.0
    %474 = vmatpush1.msra.mxu0 0.0
    %475 = vmatprep.subr.mxu0 0.0
    %476 = vmatpush1.msra.mxu0 0.0
    %477 = vmatprep.subr.mxu0 0.0
    %478 = vmatpush1.msra.mxu0 0.0
    %479 = vmatprep.subr.mxu0 0.0
    %480 = vmatpush1.msra.mxu0 0.0
    %481 = vmatprep.subr.mxu0 0.0
    %482 = vmatpush1.msra.mxu0 0.0
    %483 = vmatprep.subr.mxu0 0.0
    %484 = vmatpush1.msra.mxu0 0.0
    %485 = vmatprep.subr.mxu0 0.0
    %486 = vmatpush1.msra.mxu0 0.0
    %487 = vmatprep.subr.mxu0 0.0
    %488 = vmatpush1.msra.mxu0 0.0
    %489 = vmatprep.subr.mxu0 0.0
    %490 = vmatpush1.msra.mxu0 0.0
    %491 = vmatprep.subr.mxu0 0.0
    %492 = vmatpush1.msra.mxu0 0.0
    %493 = vmatprep.subr.mxu0 0.0
    %494 = vmatpush1.msra.mxu0 0.0
    %495 = vmatprep.subr.mxu0 0.0
    %496 = vmatpush1.msra.mxu0 0.0
    %497 = vmatprep.subr.mxu0 0.0
    %498 = vmatpush1.msra.mxu0 0.0
    %499 = vmatprep.subr.mxu0 0.0
    %500 = vmatpush1.msra.mxu0 0.0
    %501 = vmatprep.subr.mxu0 0.0
    %502 = vmatpush1.msra.mxu0 0.0
    %503 = vmatprep.subr.mxu0 0.0
    %504 = vmatpush1.msra.mxu0 0.0
    %505 = vmatprep.subr.mxu0 0.0
    %506 = vmatpush1.msra.mxu0 0.0
    %507 = vmatprep.subr.mxu0 0.0
    %508 = vmatpush1.msra.mxu0 0.0
    %509 = vmatprep.subr.mxu0 0.0
    %510 = vmatpush1.msra.mxu0 0.0
    %511 = vmatprep.subr.mxu0 0.0
    %512 = vmatpush1.msra.mxu0 0.0
    %513 = vmatprep.subr.mxu0 0.0
    %514 = vmatpush1.msra.mxu0 0.0
    %515 = vmatprep.subr.mxu0 0.0
    %516 = vmatpush1.msra.mxu0 0.0
    %517 = vmatprep.subr.mxu0 0.0
    %518 = vmatpush1.msra.mxu0 0.0
    %519 = vmatprep.subr.mxu0 0.0
    %520 = vmatpush1.msra.mxu0 0.0
    %521 = vmatprep.subr.mxu0 0.0
    %522 = vmatpush1.msra.mxu0 0.0
    %523 = vmatprep.subr.mxu0 0.0
    %524 = vmatpush1.msra.mxu0 0.0
    %525 = vmatprep.subr.mxu0 0.0
    %526 = vmatpush1.msra.mxu0 0.0
    %527 = vmatprep.subr.mxu0 0.0
    %528 = vmatpush1.msra.mxu0 0.0
    %529 = vmatprep.subr.mxu0 0.0
    %530 = vmatpush1.msra.mxu0 0.0
    %531 = vmatprep.subr.mxu0 0.0
    %532 = vmatpush1.msra.mxu0 0.0
    %533 = vmatprep.subr.mxu0 0.0
    %534 = vmatpush1.msra.mxu0 0.0
    %535 = vmatprep.mubr.f32.mxu0 0.0
    %v536 = vand.u32 %v201, 4294901760
    %v537 = vsub.f32 %v201, %v536
    %v538 = vand.u32 %v537, 4294901760
    %539 = vmatmul.mubr.f32.gmra.mrb[0].mxu0 %v538
    %v540 = vpop.f32.mrb[0].mxu0
    %v541 = vadd.f32 %v457, %v540
    %v542 = vpop.f32.mrb[0].mxu0
    %v543 = vadd.f32 %v459, %v542
    %544 = vmatprep.mubr.f32.mxu0 0.0
    %v545 = vand.u32 %v204, 4294901760
    %v546 = vsub.f32 %v204, %v545
    %v547 = vand.u32 %v546, 4294901760
    %548 = vmatmul.mubr.f32.gmra.mrb[0].mxu0 %v547
    %v549 = vpop.f32.mrb[0].mxu0
    %v550 = vadd.f32 %v465, %v549
    %v551 = vpop.f32.mrb[0].mxu0
    %v552 = vadd.f32 %v467, %v551
    %553 = vdwg.mxu0
    %v554 = vand.u32 %v192, 4294901760
    %v555 = vsub.f32 %v192, %v554
    %v556 = vand.u32 %v555, 4294901760
    %557 = vmatprep.subr.mxu0 %v556
    %v558 = vand.u32 %v191, 4294901760
    %v559 = vsub.f32 %v191, %v558
    %v560 = vand.u32 %v559, 4294901760
    %561 = vmatpush1.msra.mxu0 %v560
    %562 = vmatprep.subr.mxu0 0.0
    %563 = vmatpush1.msra.mxu0 0.0
    %564 = vmatprep.subr.mxu0 0.0
    %565 = vmatpush1.msra.mxu0 0.0
    %566 = vmatprep.subr.mxu0 0.0
    %567 = vmatpush1.msra.mxu0 0.0
    %568 = vmatprep.subr.mxu0 0.0
    %569 = vmatpush1.msra.mxu0 0.0
    %570 = vmatprep.subr.mxu0 0.0
    %571 = vmatpush1.msra.mxu0 0.0
    %572 = vmatprep.subr.mxu0 0.0
    %573 = vmatpush1.msra.mxu0 0.0
    %574 = vmatprep.subr.mxu0 0.0
    %575 = vmatpush1.msra.mxu0 0.0
    %576 = vmatprep.subr.mxu0 0.0
    %577 = vmatpush1.msra.mxu0 0.0
    %578 = vmatprep.subr.mxu0 0.0
    %579 = vmatpush1.msra.mxu0 0.0
    %580 = vmatprep.subr.mxu0 0.0
    %581 = vmatpush1.msra.mxu0 0.0
    %582 = vmatprep.subr.mxu0 0.0
    %583 = vmatpush1.msra.mxu0 0.0
    %584 = vmatprep.subr.mxu0 0.0
    %585 = vmatpush1.msra.mxu0 0.0
    %586 = vmatprep.subr.mxu0 0.0
    %587 = vmatpush1.msra.mxu0 0.0
    %588 = vmatprep.subr.mxu0 0.0
    %589 = vmatpush1.msra.mxu0 0.0
    %590 = vmatprep.subr.mxu0 0.0
    %591 = vmatpush1.msra.mxu0 0.0
    %592 = vmatprep.subr.mxu0 0.0
    %593 = vmatpush1.msra.mxu0 0.0
    %594 = vmatprep.subr.mxu0 0.0
    %595 = vmatpush1.msra.mxu0 0.0
    %596 = vmatprep.subr.mxu0 0.0
    %597 = vmatpush1.msra.mxu0 0.0
    %598 = vmatprep.subr.mxu0 0.0
    %599 = vmatpush1.msra.mxu0 0.0
    %600 = vmatprep.subr.mxu0 0.0
    %601 = vmatpush1.msra.mxu0 0.0
    %602 = vmatprep.subr.mxu0 0.0
    %603 = vmatpush1.msra.mxu0 0.0
    %604 = vmatprep.subr.mxu0 0.0
    %605 = vmatpush1.msra.mxu0 0.0
    %606 = vmatprep.subr.mxu0 0.0
    %607 = vmatpush1.msra.mxu0 0.0
    %608 = vmatprep.subr.mxu0 0.0
    %609 = vmatpush1.msra.mxu0 0.0
    %610 = vmatprep.subr.mxu0 0.0
    %611 = vmatpush1.msra.mxu0 0.0
    %612 = vmatprep.subr.mxu0 0.0
    %613 = vmatpush1.msra.mxu0 0.0
    %614 = vmatprep.subr.mxu0 0.0
    %615 = vmatpush1.msra.mxu0 0.0
    %616 = vmatprep.subr.mxu0 0.0
    %617 = vmatpush1.msra.mxu0 0.0
    %618 = vmatprep.subr.mxu0 0.0
    %619 = vmatpush1.msra.mxu0 0.0
    %620 = vmatprep.subr.mxu0 0.0
    %621 = vmatpush1.msra.mxu0 0.0
    %622 = vmatprep.subr.mxu0 0.0
    %623 = vmatpush1.msra.mxu0 0.0
    %624 = vmatprep.mubr.f32.mxu0 0.0
    %v625 = vand.u32 %v201, 4294901760
    %626 = vmatmul.mubr.f32.gmra.mrb[0].mxu0 %v625
    %v627 = vpop.f32.mrb[0].mxu0
    %v628 = vadd.f32 %v541, %v627
    %v629 = vpop.f32.mrb[0].mxu0
    %v630 = vadd.f32 %v543, %v629
    %631 = vmatprep.mubr.f32.mxu0 0.0
    %v632 = vand.u32 %v204, 4294901760
    %633 = vmatmul.mubr.f32.gmra.mrb[0].mxu0 %v632
    %v634 = vpop.f32.mrb[0].mxu0
    %v635 = vadd.f32 %v550, %v634
    %v636 = vpop.f32.mrb[0].mxu0
    %v637 = vadd.f32 %v552, %v636
    %638 = vdwg.mxu0
    %v639 = vand.u32 %v192, 4294901760
    %640 = vmatprep.subr.mxu0 %v639
    %v641 = vand.u32 %v191, 4294901760
    %642 = vmatpush1.msra.mxu0 %v641
    %643 = vmatprep.subr.mxu0 0.0
    %644 = vmatpush1.msra.mxu0 0.0
    %645 = vmatprep.subr.mxu0 0.0
    %646 = vmatpush1.msra.mxu0 0.0
    %647 = vmatprep.subr.mxu0 0.0
    %648 = vmatpush1.msra.mxu0 0.0
    %649 = vmatprep.subr.mxu0 0.0
    %650 = vmatpush1.msra.mxu0 0.0
    %651 = vmatprep.subr.mxu0 0.0
    %652 = vmatpush1.msra.mxu0 0.0
    %653 = vmatprep.subr.mxu0 0.0
    %654 = vmatpush1.msra.mxu0 0.0
    %655 = vmatprep.subr.mxu0 0.0
    %656 = vmatpush1.msra.mxu0 0.0
    %657 = vmatprep.subr.mxu0 0.0
    %658 = vmatpush1.msra.mxu0 0.0
    %659 = vmatprep.subr.mxu0 0.0
    %660 = vmatpush1.msra.mxu0 0.0
    %661 = vmatprep.subr.mxu0 0.0
    %662 = vmatpush1.msra.mxu0 0.0
    %663 = vmatprep.subr.mxu0 0.0
    %664 = vmatpush1.msra.mxu0 0.0
    %665 = vmatprep.subr.mxu0 0.0
    %666 = vmatpush1.msra.mxu0 0.0
    %667 = vmatprep.subr.mxu0 0.0
    %668 = vmatpush1.msra.mxu0 0.0
    %669 = vmatprep.subr.mxu0 0.0
    %670 = vmatpush1.msra.mxu0 0.0
    %671 = vmatprep.subr.mxu0 0.0
    %672 = vmatpush1.msra.mxu0 0.0
    %673 = vmatprep.subr.mxu0 0.0
    %674 = vmatpush1.msra.mxu0 0.0
    %675 = vmatprep.subr.mxu0 0.0
    %676 = vmatpush1.msra.mxu0 0.0
    %677 = vmatprep.subr.mxu0 0.0
    %678 = vmatpush1.msra.mxu0 0.0
    %679 = vmatprep.subr.mxu0 0.0
    %680 = vmatpush1.msra.mxu0 0.0
    %681 = vmatprep.subr.mxu0 0.0
    %682 = vmatpush1.msra.mxu0 0.0
    %683 = vmatprep.subr.mxu0 0.0
    %684 = vmatpush1.msra.mxu0 0.0
    %685 = vmatprep.subr.mxu0 0.0
    %686 = vmatpush1.msra.mxu0 0.0
    %687 = vmatprep.subr.mxu0 0.0
    %688 = vmatpush1.msra.mxu0 0.0
    %689 = vmatprep.subr.mxu0 0.0
    %690 = vmatpush1.msra.mxu0 0.0
    %691 = vmatprep.subr.mxu0 0.0
    %692 = vmatpush1.msra.mxu0 0.0
    %693 = vmatprep.subr.mxu0 0.0
    %694 = vmatpush1.msra.mxu0 0.0
    %695 = vmatprep.subr.mxu0 0.0
    %696 = vmatpush1.msra.mxu0 0.0
    %697 = vmatprep.subr.mxu0 0.0
    %698 = vmatpush1.msra.mxu0 0.0
    %699 = vmatprep.subr.mxu0 0.0
    %700 = vmatpush1.msra.mxu0 0.0
    %701 = vmatprep.subr.mxu0 0.0
    %702 = vmatpush1.msra.mxu0 0.0
    %703 = vmatprep.subr.mxu0 0.0
    %704 = vmatpush1.msra.mxu0 0.0
    %705 = vmatprep.mubr.f32.mxu0 0.0
    %v706 = vand.u32 %v201, 4294901760
    %707 = vmatmul.mubr.f32.gmra.mrb[0].mxu0 %v706
    %v708 = vpop.f32.mrb[0].mxu0
    %v709 = vadd.f32 %v628, %v708
    %v710 = vpop.f32.mrb[0].mxu0
    %v711 = vadd.f32 %v630, %v710
    %712 = vmatprep.mubr.f32.mxu0 0.0
    %v713 = vand.u32 %v204, 4294901760
    %714 = vmatmul.mubr.f32.gmra.mrb[0].mxu0 %v713
    %v715 = vpop.f32.mrb[0].mxu0
    %v716 = vadd.f32 %v635, %v715
    %v717 = vpop.f32.mrb[0].mxu0
    %v718 = vadd.f32 %v637, %v717
    %719 = vdwg.mxu0
    %v720 = vmax.f32 %v709, 0.0
    %v721 = vmax.f32 %v711, 0.0
    %v722 = vmax.f32 %v716, 0.0
    %v723 = vmax.f32 %v718, 0.0
    %724 = vst [vmem:[%s5] sm:$0xff] %v720
    %725 = vst [vmem:[%s5 + $0x8] sm:$0xff] %v721
    %726 = vst [vmem:[%s5 + $0x10] sm:$0xff] %v722
    %727 = vst [vmem:[%s5 + $0x18] sm:$0xff] %v723
    // Predicated region
    $region26: #{depthwise_separable_conv.1} parent=1 // pred_check
      _
    $region27: #{depthwise_separable_conv.1} parent=1 // pred_check_branch
      %729 = sbr.rel (0) target = $region29
    $region28: #{depthwise_separable_conv.1} parent=1 // pred_region
      _
    $region29: #{depthwise_separable_conv.1} parent=1 // pred_fallthru
      _
    // Predicated region
    $region30: #{depthwise_separable_conv.1} parent=1 // pred_check
      _
    $region31: #{depthwise_separable_conv.1} parent=1 // pred_check_branch
      %731 = sbr.rel (0) target = $region33
    $region32: #{depthwise_separable_conv.1} parent=1 // pred_region
      _
    $region33: #{depthwise_separable_conv.1} parent=1 // pred_fallthru
      _
    %732 = vsyncpa [#allocation3], 1

</llo_original>
